<compile_context>
chip_gen: v7x
topology: tpu7x:2x2x1
jax: 0.10.0
libtpu: 0.0.40
codegen_flags: <defaults>
</compile_context>

<pallas_src>
import functools

import jax
import jax.numpy as jnp
import numpy as np
from jax.experimental import pallas as pl
from jax.experimental.pallas import tpu as pltpu


def _round_up(x: int, m: int) -> int:
    return (x + m - 1) // m * m


def _fractal_kernel(x_ref, w_ref, b_ref, o_ref, *, depth: int, compute_dtype):
    """One grid step processes a (TB, Dp) tile of the (padded) batch.

    x_ref: (TB, Dp)         input tile, compute_dtype (bf16 or f32)
    w_ref: (depth, Dp, Dp)  fully folded weights (entanglement + gates), compute_dtype
    b_ref: (depth, 1, Dp)   folded biases, f32
    o_ref: (TB, Dp)         output tile, f32
    """
    # Depth is small & static -> fully unrolled chain of single MXU matmuls.
    state = jnp.dot(x_ref[...], w_ref[0],
                    preferred_element_type=jnp.float32) + b_ref[0]
    for d in range(1, depth):
        state = jnp.dot(state.astype(compute_dtype), w_ref[d],
                        preferred_element_type=jnp.float32) + b_ref[d]
    o_ref[...] = state.astype(o_ref.dtype)


def fold_fractal_params(w, b, e, g, *, ssf: float, compute_dtype=jnp.bfloat16):
    """Fold entanglement + all energy gates into the linear weights and pad the
    feature dim to a lane-dense multiple of 128.

    w: (depth, D, D)  nn.Linear weight (out, in)
    b: (depth, D)     nn.Linear bias
    e: (depth, D, D)  entanglement gates
    g: (D,)           energy gate (pre-sigmoid)
    """
    depth, D, _ = w.shape
    hi = jax.lax.Precision.HIGHEST

    ehat = jnp.eye(D, dtype=jnp.float32)[None] + ssf * e.astype(jnp.float32)
    w_t = jnp.transpose(w, (0, 2, 1)).astype(jnp.float32)          # (depth, in, out)
    w_f = jnp.einsum("dio,dok->dik", w_t, ehat, precision=hi)      # W' = W^T @ (I+ssf*E)
    b_f = jnp.einsum("do,dok->dk", b.astype(jnp.float32), ehat, precision=hi)
    gate = jax.nn.sigmoid(g.astype(jnp.float32))                   # (D,)

    # Gate after layer d-1 -> row-scale layer d (input side), d = 1..depth-1.
    if depth > 1:
        row_scale = jnp.concatenate(
            [jnp.ones((1, D), jnp.float32),
             jnp.tile(gate[None, :], (depth - 1, 1))], axis=0)
        w_f = row_scale[:, :, None] * w_f
    # Gate after the last layer -> column-scale its weights and scale its bias,
    # so the kernel needs no gate multiply at all.
    w_f = w_f.at[depth - 1].multiply(gate[None, :])
    b_f = b_f.at[depth - 1].multiply(gate)

    # Pad features to a lane-dense multiple of 128. Padded rows/cols are zero,
    # so padded output columns stay exactly zero and are sliced off later.
    Dp = max(128, _round_up(D, 128))
    w_pad = jnp.zeros((depth, Dp, Dp), jnp.float32).at[:, :D, :D].set(w_f)
    b_pad = jnp.zeros((depth, 1, Dp), jnp.float32).at[:, 0, :D].set(b_f)

    return w_pad.astype(compute_dtype), b_pad, Dp


def fractal_neuron_forward(x, w, b, e, g, *, ssf: float,
                           batch_tile: int = 256,
                           compute_dtype=jnp.bfloat16):
    """x: (B, D) float32. Returns (B, D) float32. Matches the PyTorch forward."""
    B, D = x.shape
    depth = w.shape[0]

    w_f, b_f, Dp = fold_fractal_params(w, b, e, g, ssf=ssf,
                                       compute_dtype=compute_dtype)

    # Batch tiling: multiple of 8 sublanes, padded so every tile is full.
    tb = _round_up(min(batch_tile, _round_up(B, 8)), 8)
    Bp = _round_up(B, tb)
    x_pad = jnp.zeros((Bp, Dp), compute_dtype).at[:B, :D].set(x.astype(compute_dtype))

    grid = (Bp // tb,)
    kernel = functools.partial(_fractal_kernel, depth=depth,
                               compute_dtype=compute_dtype)

    # Scoped-VMEM budget: double-buffered weights/bias + double-buffered I/O tiles.
    itm = jnp.dtype(compute_dtype).itemsize
    w_bytes = depth * Dp * Dp * itm + depth * Dp * 4
    io_bytes = 2 * tb * Dp * (itm + 4)
    vmem_limit = int(min(64 << 20, max(32 << 20, 2 * w_bytes + 2 * io_bytes + (4 << 20))))

    out = pl.pallas_call(
        kernel,
        out_shape=jax.ShapeDtypeStruct((Bp, Dp), jnp.float32),
        grid_spec=pltpu.PrefetchScalarGridSpec(
            num_scalar_prefetch=0,
            grid=grid,
            in_specs=[
                pl.BlockSpec((tb, Dp), lambda i: (i, 0)),            # x tile
                pl.BlockSpec((depth, Dp, Dp), lambda i: (0, 0, 0)),  # folded W (resident)
                pl.BlockSpec((depth, 1, Dp), lambda i: (0, 0, 0)),   # folded b (resident)
            ],
            out_specs=pl.BlockSpec((tb, Dp), lambda i: (i, 0)),
        ),
        compiler_params=pltpu.CompilerParams(
            dimension_semantics=("parallel",),
            vmem_limit_bytes=vmem_limit),
    )(x_pad, w_f, b_f)

    return out[:B, :D]


def fractal_neuron_reference_np(x, w, b, e, g, ssf):
    """Exact (float64, host) reference of the PyTorch forward."""
    state = np.asarray(x, np.float64)
    gate = 1.0 / (1.0 + np.exp(-np.asarray(g, np.float64)))
    for d in range(w.shape[0]):
        state = state @ np.asarray(w[d], np.float64).T + np.asarray(b[d], np.float64)
        state = state + ssf * (state @ np.asarray(e[d], np.float64))
        state = state * gate
    return state


if __name__ == "__main__":
    # Shapes consistent with the module: batch=200, input_dim=32, depth=3.
    # (batch chosen so the padded grid has 2 steps -> exercises tiling/padding
    #  and gives both v7x TensorCores work.)
    B, D, DEPTH, SSF = 200, 32, 3, 0.7

    key = jax.random.PRNGKey(0)
    k_x, k_w, k_b, k_e = jax.random.split(key, 4)

    x = jax.random.normal(k_x, (B, D), dtype=jnp.float32)
    bound = 1.0 / np.sqrt(D)
    # nn.Linear: weight (out, in), bias (out); init ~ U(-1/sqrt(in), 1/sqrt(in)).
    w = jax.random.uniform(k_w, (DEPTH, D, D), jnp.float32, -bound, bound)
    b = jax.random.uniform(k_b, (DEPTH, D), jnp.float32, -bound, bound)
    e = jax.random.normal(k_e, (DEPTH, D, D), dtype=jnp.float32)   # entanglement ~ randn
    g = jnp.ones((D,), dtype=jnp.float32)                          # energy_gate = ones

    ref = fractal_neuron_reference_np(np.asarray(x), np.asarray(w), np.asarray(b),
                                      np.asarray(e), np.asarray(g), SSF)
    scale = float(np.max(np.abs(ref))) + 1e-6

    # f32 compute path: checks the fused/folded algebra tightly.
    out_f32 = jax.block_until_ready(
        fractal_neuron_forward(x, w, b, e, g, ssf=SSF, batch_tile=128,
                               compute_dtype=jnp.float32))
    err_f32 = float(np.max(np.abs(np.asarray(out_f32) - ref))) / scale
    assert err_f32 < 2e-2, f"f32 path scaled max error too large: {err_f32}"

    # bf16 compute path (the optimized MXU path): looser tolerance.
    out_bf16 = jax.block_until_ready(
        fractal_neuron_forward(x, w, b, e, g, ssf=SSF, batch_tile=128,
                               compute_dtype=jnp.bfloat16))
    err_bf16 = float(np.max(np.abs(np.asarray(out_bf16) - ref))) / scale
    assert err_bf16 < 5e-2, f"bf16 path scaled max error too large: {err_bf16}"

    print("KERNEL_OK")
</pallas_src>

<mosaic_0001>
module attributes {stable_mosaic.version = 11 : i64} {
  func.func @_fractal_kernel(%arg0: i32, %arg1: memref<128x128xf32, #tpu.memory_space<vmem>>, %arg2: memref<3x128x128xf32, #tpu.memory_space<vmem>>, %arg3: memref<3x1x128xf32, #tpu.memory_space<vmem>>, %arg4: memref<128x128xf32, #tpu.memory_space<vmem>>) attributes {dimension_semantics = [#tpu.dimension_semantics<parallel>], iteration_bounds = array<i64: 2>, scalar_prefetch = 0 : i64, scratch_operands = 0 : i64, tpu.core_type = #tpu.core_type<tc>, window_params = [{transform_indices = @transform_0, window_bounds = array<i64: 128, 128>}, {pipeline_mode = #tpu.pipeline_mode<synchronous>, transform_indices = @transform_1, window_bounds = array<i64: 3, 128, 128>}, {pipeline_mode = #tpu.pipeline_mode<synchronous>, transform_indices = @transform_2, window_bounds = array<i64: 3, 1, 128>}, {transform_indices = @transform_3, window_bounds = array<i64: 128, 128>}]} {
    %c0 = arith.constant 0 : index
    %c0_0 = arith.constant 0 : index
    %0 = vector.load %arg1[%c0, %c0_0] : memref<128x128xf32, #tpu.memory_space<vmem>>, vector<128x128xf32>
    %c0_1 = arith.constant 0 : index
    %c0_2 = arith.constant 0 : index
    %c0_3 = arith.constant 0 : index
    %1 = vector.load %arg2[%c0_1, %c0_2, %c0_3] : memref<3x128x128xf32, #tpu.memory_space<vmem>>, vector<1x128x128xf32>
    %2 = vector.shape_cast %1 : vector<1x128x128xf32> to vector<128x128xf32>
    %cst = arith.constant dense<0.000000e+00> : vector<128x128xf32>
    %3 = tpu.matmul %0, %2, %cst {dimension_numbers = #tpu.dot_dimension_numbers<[1], [0], [0], [1], [0, 0, 1, 1], [], []>} : vector<128x128xf32>, vector<128x128xf32>, vector<128x128xf32> -> vector<128x128xf32>
    %c0_4 = arith.constant 0 : index
    %c0_5 = arith.constant 0 : index
    %c0_6 = arith.constant 0 : index
    %4 = vector.load %arg3[%c0_4, %c0_5, %c0_6] : memref<3x1x128xf32, #tpu.memory_space<vmem>>, vector<1x1x128xf32>
    %5 = vector.shape_cast %4 : vector<1x1x128xf32> to vector<1x128xf32>
    %6 = vector.broadcast %5 : vector<1x128xf32> to vector<128x128xf32>
    %7 = arith.addf %3, %6 : vector<128x128xf32>
    %c1 = arith.constant 1 : index
    %c0_7 = arith.constant 0 : index
    %c0_8 = arith.constant 0 : index
    %8 = vector.load %arg2[%c1, %c0_7, %c0_8] : memref<3x128x128xf32, #tpu.memory_space<vmem>>, vector<1x128x128xf32>
    %9 = vector.shape_cast %8 : vector<1x128x128xf32> to vector<128x128xf32>
    %cst_9 = arith.constant dense<0.000000e+00> : vector<128x128xf32>
    %10 = tpu.matmul %7, %9, %cst_9 {dimension_numbers = #tpu.dot_dimension_numbers<[1], [0], [0], [1], [0, 0, 1, 1], [], []>} : vector<128x128xf32>, vector<128x128xf32>, vector<128x128xf32> -> vector<128x128xf32>
    %c1_10 = arith.constant 1 : index
    %c0_11 = arith.constant 0 : index
    %c0_12 = arith.constant 0 : index
    %11 = vector.load %arg3[%c1_10, %c0_11, %c0_12] : memref<3x1x128xf32, #tpu.memory_space<vmem>>, vector<1x1x128xf32>
    %12 = vector.shape_cast %11 : vector<1x1x128xf32> to vector<1x128xf32>
    %13 = vector.broadcast %12 : vector<1x128xf32> to vector<128x128xf32>
    %14 = arith.addf %10, %13 : vector<128x128xf32>
    %c2 = arith.constant 2 : index
    %c0_13 = arith.constant 0 : index
    %c0_14 = arith.constant 0 : index
    %15 = vector.load %arg2[%c2, %c0_13, %c0_14] : memref<3x128x128xf32, #tpu.memory_space<vmem>>, vector<1x128x128xf32>
    %16 = vector.shape_cast %15 : vector<1x128x128xf32> to vector<128x128xf32>
    %cst_15 = arith.constant dense<0.000000e+00> : vector<128x128xf32>
    %17 = tpu.matmul %14, %16, %cst_15 {dimension_numbers = #tpu.dot_dimension_numbers<[1], [0], [0], [1], [0, 0, 1, 1], [], []>} : vector<128x128xf32>, vector<128x128xf32>, vector<128x128xf32> -> vector<128x128xf32>
    %c2_16 = arith.constant 2 : index
    %c0_17 = arith.constant 0 : index
    %c0_18 = arith.constant 0 : index
    %18 = vector.load %arg3[%c2_16, %c0_17, %c0_18] : memref<3x1x128xf32, #tpu.memory_space<vmem>>, vector<1x1x128xf32>
    %19 = vector.shape_cast %18 : vector<1x1x128xf32> to vector<1x128xf32>
    %20 = vector.broadcast %19 : vector<1x128xf32> to vector<128x128xf32>
    %21 = arith.addf %17, %20 : vector<128x128xf32>
    %c0_19 = arith.constant 0 : index
    %c0_20 = arith.constant 0 : index
    %22 = vector.load %arg4[%c0_19, %c0_20] : memref<128x128xf32, #tpu.memory_space<vmem>>, vector<128x128xf32>
    tpu.vector_store %arg4[%c0_19, %c0_20], %21 {strides = array<i32>} : memref<128x128xf32, #tpu.memory_space<vmem>>, vector<128x128xf32>,
    return
  }
  func.func @transform_0(%arg0: i32) -> (i32, i32) {
    %c0_i32 = arith.constant 0 : i32
    %c0_i32_0 = arith.constant 0 : i32
    return %arg0, %c0_i32 : i32, i32
  }
  func.func @transform_1(%arg0: i32) -> (i32, i32, i32) {
    %c0_i32 = arith.constant 0 : i32
    %c0_i32_0 = arith.constant 0 : i32
    %c0_i32_1 = arith.constant 0 : i32
    %c0_i32_2 = arith.constant 0 : i32
    return %c0_i32, %c0_i32_0, %c0_i32_1 : i32, i32, i32
  }
  func.func @transform_2(%arg0: i32) -> (i32, i32, i32) {
    %c0_i32 = arith.constant 0 : i32
    %c0_i32_0 = arith.constant 0 : i32
    %c0_i32_1 = arith.constant 0 : i32
    %c0_i32_2 = arith.constant 0 : i32
    return %c0_i32, %c0_i32_0, %c0_i32_1 : i32, i32, i32
  }
  func.func @transform_3(%arg0: i32) -> (i32, i32) {
    %c0_i32 = arith.constant 0 : i32
    %c0_i32_0 = arith.constant 0 : i32
    return %arg0, %c0_i32 : i32, i32
  }
}

</mosaic_0001>

<llo_original>
// kernel: tpu_custom_call.1
$region0: #{tpu_custom_call.1}
  #allocation0 [shape = 'u32[]', space=smem, size = 0x4, offset = 0x4, fixed_abs, tag = 'smem constant byte address 0x4 - core index']
  #allocation1 [shape = 'u32[144,128]{1,0:T(1,128)}', space=vmem, size = 0x12000, scoped, tag = 'internal scratch']
  %s0 = inlined_call_operand.hbm [shape: f32[256,128], index: 0, kind: input, shape index: {}]
  %s1 = inlined_call_operand.hbm [shape: f32[3,128,128], index: 1, kind: input, shape index: {}]
  %s2 = inlined_call_operand.vmem [shape: f32[3,1,128], index: 2, kind: input, shape index: {}]
  %s3 = inlined_call_operand.hbm [shape: f32[256,128], index: 3, kind: output, shape index: {}]
  %s4 = sld [smem:[#allocation0]]
  $region53: #{tpu_custom_call.1} parent=0
    _
  %s6 = ssub.s32 1, %s4
  %s7 = scalar_select 0, %s6, %s4
  $region1: #{tpu_custom_call.1} parent=0
    #allocation2 [shape = 'u8[131072]{0}', space=vmem, size = 0x20000, scoped, tag = 'input window, operand 0']
    #allocation3 [shape = 's32[2]{0}', space=sflag, size = 0x8, scoped, tag = 'scoped memory for tpu_custom_call.1']
    #allocation4 [shape = 's32[2]{0}', space=sflag, size = 0x8, scoped, tag = 'scoped memory for tpu_custom_call.1']
    #allocation5 [shape = 'u8[196608]{0}', space=vmem, size = 0x30000, scoped, tag = 'input window, operand 1, single buffered']
    #allocation6 [shape = 's32[1]{0}', space=sflag, size = 0x4, scoped, tag = 'scoped memory for tpu_custom_call.1']
    #allocation7 [shape = 'u8[131072]{0}', space=vmem, size = 0x20000, scoped, tag = 'output window, operand 0']
    %8 = vsyncpa [#allocation3], 0
    %s9 = scalar_lea.sflag [#allocation3], 1
    %10 = vsyncpa %s9, 0
    %11 = vsyncpa [#allocation6], 0
    %12 = vsyncpa [#allocation4], 0
    %s13 = scalar_lea.sflag [#allocation4], 1
    %14 = vsyncpa %s13, 0
    loop: start=0, step=1, limit=4
    $region2: #{tpu_custom_call.1} parent=1 // loop_pre_header
      _
    $region3: #{tpu_custom_call.1} parent=1 // loop_header
      %s16 = sphi 0, %s20
      %p17 = scmp.ge.s32.totalorder %s16, 4
      %s26 = sphi 0, %s28
      %s29 = sphi 0, %s26
      %s30 = sphi 0, %s29
      %s46 = sphi 0, %s30
      %s50 = sphi 0, %s50
      %s52 = sphi 0, %s50
      %s53 = sphi 0, %s52
      %s67 = sphi 0, %s53
      %s71 = sphi 0, %s71
      %s73 = sphi 0, %s71
      %s74 = sphi 0, %s73
      %s88 = sphi 0, %s74
      %s94 = sphi 0, %s96
      %s97 = sphi 0, %s94
      %s98 = sphi 0, %s97
      %s114 = sphi 0, %s98
    $region4: #{tpu_custom_call.1} parent=1 // loop_header_branch
      %19 = sbr.rel (%p17) target = $region8
    $region5: #{tpu_custom_call.1} parent=1 // loop_body
      %s21 = ssub.s32 %s16, 1
      %s22 = ssub.s32 %s16, 2
      %s23 = sadd.s32 %s16, 1
      %s24 = ssub.s32 %s16, %s23
      %p25 = scmp.eq.s32.totalorder %s24, 0
      %s27 = sadd.s32 %s26, 1
      %s28 = scalar_select %p25, %s26, %s27
      %p31 = pneg %p25
      %p32 = scmp.eq.s32.totalorder %s16, 1
      %p33 = por %p31, %p32
      %p34 = scmp.ne.s32.totalorder %s26, %s29
      %p35 = scmp.eq.s32.totalorder %s16, 0
      %p36 = por %p34, %p35
      %p37 = scmp.ne.s32.totalorder %s26, %s29
      %p38 = scmp.eq.s32.totalorder %s21, 1
      %p39 = por %p37, %p38
      %p40 = scmp.ne.s32.totalorder %s29, %s30
      %p41 = scmp.eq.s32.totalorder %s21, 0
      %p42 = por %p40, %p41
      %p43 = scmp.ne.s32.totalorder %s29, %s30
      %p44 = scmp.eq.s32.totalorder %s22, 1
      %p45 = por %p43, %p44
      %p47 = scmp.ne.s32.totalorder %s30, %s46
      %p48 = scmp.eq.s32.totalorder %s22, 0
      %p49 = por %p47, %p48
      %s51 = sadd.s32 %s50, 1
      %p54 = scmp.eq.s32.totalorder %s16, 1
      %p55 = scmp.ne.s32.totalorder %s50, %s52
      %p56 = scmp.eq.s32.totalorder %s16, 0
      %p57 = por %p55, %p56
      %p58 = scmp.ne.s32.totalorder %s50, %s52
      %p59 = scmp.eq.s32.totalorder %s21, 1
      %p60 = por %p58, %p59
      %p61 = scmp.ne.s32.totalorder %s52, %s53
      %p62 = scmp.eq.s32.totalorder %s21, 0
      %p63 = por %p61, %p62
      %p64 = scmp.ne.s32.totalorder %s52, %s53
      %p65 = scmp.eq.s32.totalorder %s22, 1
      %p66 = por %p64, %p65
      %p68 = scmp.ne.s32.totalorder %s53, %s67
      %p69 = scmp.eq.s32.totalorder %s22, 0
      %p70 = por %p68, %p69
      %s72 = sadd.s32 %s71, 1
      %p75 = scmp.eq.s32.totalorder %s16, 1
      %p76 = scmp.ne.s32.totalorder %s71, %s73
      %p77 = scmp.eq.s32.totalorder %s16, 0
      %p78 = por %p76, %p77
      %p79 = scmp.ne.s32.totalorder %s71, %s73
      %p80 = scmp.eq.s32.totalorder %s21, 1
      %p81 = por %p79, %p80
      %p82 = scmp.ne.s32.totalorder %s73, %s74
      %p83 = scmp.eq.s32.totalorder %s21, 0
      %p84 = por %p82, %p83
      %p85 = scmp.ne.s32.totalorder %s73, %s74
      %p86 = scmp.eq.s32.totalorder %s22, 1
      %p87 = por %p85, %p86
      %p89 = scmp.ne.s32.totalorder %s74, %s88
      %p90 = scmp.eq.s32.totalorder %s22, 0
      %p91 = por %p89, %p90
      %s92 = ssub.s32 %s16, %s23
      %p93 = scmp.eq.s32.totalorder %s92, 0
      %s95 = sadd.s32 %s94, 1
      %s96 = scalar_select %p93, %s94, %s95
      %p99 = pneg %p93
      %p100 = scmp.eq.s32.totalorder %s16, 1
      %p101 = por %p99, %p100
      %p102 = scmp.ne.s32.totalorder %s94, %s97
      %p103 = scmp.eq.s32.totalorder %s16, 0
      %p104 = por %p102, %p103
      %p105 = scmp.ne.s32.totalorder %s94, %s97
      %p106 = scmp.eq.s32.totalorder %s21, 1
      %p107 = por %p105, %p106
      %p108 = scmp.ne.s32.totalorder %s97, %s98
      %p109 = scmp.eq.s32.totalorder %s21, 0
      %p110 = por %p108, %p109
      %p111 = scmp.ne.s32.totalorder %s97, %s98
      %p112 = scmp.eq.s32.totalorder %s22, 1
      %p113 = por %p111, %p112
      %p115 = scmp.ne.s32.totalorder %s98, %s114
      %p116 = scmp.eq.s32.totalorder %s22, 0
      %p117 = por %p115, %p116
      %p118 = scmp.le.s32.totalorder 1, %s16
      %p119 = scmp.lt.s32.totalorder %s16, 3
      %p120 = pnand %p118, %p119
      %p121 = pneg %p120
      // Predicated region
      $region9: #{tpu_custom_call.1} parent=5 // pred_check
        _
      $region10: #{tpu_custom_call.1} parent=5 // pred_check_branch
        %123 = sbr.rel (%p120) target = $region12
      $region11: #{tpu_custom_call.1} parent=5 // pred_region
        %s124 = ssub.s32 %s16, 1
        // Predicated region
        $region13: #{tpu_custom_call.1} parent=11 // pred_check
          %p125 = pneg %p63
        $region14: #{tpu_custom_call.1} parent=11 // pred_check_branch
          %127 = sbr.rel (%p125) target = $region16
        $region15: #{tpu_custom_call.1} parent=11 // pred_region
          %s129 = ssub.s32 6144, 6144
          %130 = vsyncadd [#allocation6], %s129
          %s131 = sshll.u32 [#allocation5], 4
          %s132 = int_to_ptr.vmem [resolvable:$true] %s131
          %137 = dma.hbm_to_vmem [thread:$0]  %s1, 6144, %s132, [#allocation6], 128, 128, 8
        $region16: #{tpu_custom_call.1} parent=11 // pred_fallthru
          _
        // Predicated region
        $region17: #{tpu_custom_call.1} parent=11 // pred_check
          %p138 = pneg %p84
        $region18: #{tpu_custom_call.1} parent=11 // pred_check_branch
          %140 = sbr.rel (%p138) target = $region20
        $region19: #{tpu_custom_call.1} parent=11 // pred_region
          _
        $region20: #{tpu_custom_call.1} parent=11 // pred_fallthru
          _
      $region12: #{tpu_custom_call.1} parent=5 // pred_fallthru
        _
      %p141 = scmp.lt.s32.totalorder %s16, 2
      // Predicated region
      $region21: #{tpu_custom_call.1} parent=5 // pred_check
        %p142 = pneg %p141
      $region22: #{tpu_custom_call.1} parent=5 // pred_check_branch
        %144 = sbr.rel (%p142) target = $region24
      $region23: #{tpu_custom_call.1} parent=5 // pred_region
        // Predicated region
        $region25: #{tpu_custom_call.1} parent=23 // pred_check
          %p145 = pneg %p36
        $region26: #{tpu_custom_call.1} parent=23 // pred_check_branch
          %147 = sbr.rel (%p145) target = $region28
        $region27: #{tpu_custom_call.1} parent=23 // pred_region
          %s148 = sand.u32 %s26, 1
          %s149 = scalar_lea.sflag [#allocation3], %s148
          %s150 = sand.u32 %s26, 1
          %s151 = smul.addr %s150, 128
          %s152 = scalar_lea.vmem [#allocation2], %s151
          %s153 = smul.u32 16, %s16
          %s155 = ssub.s32 2048, 2048
          %156 = vsyncadd %s149, %s155
          %s157 = smul.addr %s153, 128
          %s158 = scalar_lea.hbm %s0, %s157
          %s159 = sshll.u32 %s152, 4
          %s160 = int_to_ptr.vmem [resolvable:$true] %s159
          %165 = dma.hbm_to_vmem [thread:$0]  %s158, 2048, %s160, %s149, 128, 128, 8
        $region28: #{tpu_custom_call.1} parent=23 // pred_fallthru
          _
      $region24: #{tpu_custom_call.1} parent=5 // pred_fallthru
        _
      %p166 = scmp.le.s32.totalorder 1, %s16
      %p167 = scmp.lt.s32.totalorder %s16, 3
      %p168 = pnand %p166, %p167
      %p169 = pneg %p168
      // Predicated region
      $region29: #{tpu_custom_call.1} parent=5 // pred_check
        _
      $region30: #{tpu_custom_call.1} parent=5 // pred_check_branch
        %171 = sbr.rel (%p168) target = $region32
      $region31: #{tpu_custom_call.1} parent=5 // pred_region
        %s172 = ssub.s32 %s16, 1
        %s173 = sand.u32 %s29, 1
        %s174 = scalar_lea.sflag [#allocation3], %s173
        %s175 = sand.u32 %s29, 1
        %s176 = smul.addr %s175, 128
        %s177 = scalar_lea.vmem [#allocation2], %s176
        // Predicated region
        $region33: #{tpu_custom_call.1} parent=31 // pred_check
          %p178 = pneg %p42
        $region34: #{tpu_custom_call.1} parent=31 // pred_check_branch
          %180 = sbr.rel (%p178) target = $region36
        $region35: #{tpu_custom_call.1} parent=31 // pred_region
          %181 = dma.done %s174, 2048
        $region36: #{tpu_custom_call.1} parent=31 // pred_fallthru
          _
        // Predicated region
        $region37: #{tpu_custom_call.1} parent=31 // pred_check
          %p182 = pneg %p63
        $region38: #{tpu_custom_call.1} parent=31 // pred_check_branch
          %184 = sbr.rel (%p182) target = $region40
        $region39: #{tpu_custom_call.1} parent=31 // pred_region
          %185 = dma.done [#allocation6], 6144
        $region40: #{tpu_custom_call.1} parent=31 // pred_fallthru
          _
        %s186 = sand.u32 %s29, 1
        %s187 = scalar_lea.sflag [#allocation3], %s186
        %s188 = sand.u32 %s29, 1
        %s189 = smul.addr %s188, 128
        %s190 = scalar_lea.vmem [#allocation2], %s189
        %p191 = pneg %p42
        %p192 = pneg %p39
        %p193 = pneg %p63
        %p194 = pneg %p60
        %p195 = pneg %p84
        %p196 = pneg %p81
        %p197 = pneg %p110
        %p198 = pneg %p107
        %s199 = sand.u32 %s97, 1
        %s200 = scalar_lea.sflag [#allocation4], %s199
        %s201 = sand.u32 %s97, 1
        %s202 = smul.addr %s201, 128
        %s203 = scalar_lea.vmem [#allocation7], %s202
        %s204 = smul.u32 16, %s21
        %s205 = smul.u32 16, %s21
        %v206 = vld [vmem:[%s177] sm:$0xff]
        %v207 = vld [vmem:[%s177 + $0x8] sm:$0xff]
        %v208 = vld [vmem:[%s177 + $0x10] sm:$0xff]
        %v209 = vld [vmem:[%s177 + $0x18] sm:$0xff]
        %v210 = vld [vmem:[%s177 + $0x20] sm:$0xff]
        %v211 = vld [vmem:[%s177 + $0x28] sm:$0xff]
        %v212 = vld [vmem:[%s177 + $0x30] sm:$0xff]
        %v213 = vld [vmem:[%s177 + $0x38] sm:$0xff]
        %v214 = vld [vmem:[%s177 + $0x40] sm:$0xff]
        %v215 = vld [vmem:[%s177 + $0x48] sm:$0xff]
        %v216 = vld [vmem:[%s177 + $0x50] sm:$0xff]
        %v217 = vld [vmem:[%s177 + $0x58] sm:$0xff]
        %v218 = vld [vmem:[%s177 + $0x60] sm:$0xff]
        %v219 = vld [vmem:[%s177 + $0x68] sm:$0xff]
        %v220 = vld [vmem:[%s177 + $0x70] sm:$0xff]
        %v221 = vld [vmem:[%s177 + $0x78] sm:$0xff]
        %v222 = vld [vmem:[#allocation5] sm:$0xff]
        %v223 = vld [vmem:[#allocation5 + $0x8] sm:$0xff]
        %v224 = vld [vmem:[#allocation5 + $0x10] sm:$0xff]
        %v225 = vld [vmem:[#allocation5 + $0x18] sm:$0xff]
        %v226 = vld [vmem:[#allocation5 + $0x20] sm:$0xff]
        %v227 = vld [vmem:[#allocation5 + $0x28] sm:$0xff]
        %v228 = vld [vmem:[#allocation5 + $0x30] sm:$0xff]
        %v229 = vld [vmem:[#allocation5 + $0x38] sm:$0xff]
        %v230 = vld [vmem:[#allocation5 + $0x40] sm:$0xff]
        %v231 = vld [vmem:[#allocation5 + $0x48] sm:$0xff]
        %v232 = vld [vmem:[#allocation5 + $0x50] sm:$0xff]
        %v233 = vld [vmem:[#allocation5 + $0x58] sm:$0xff]
        %v234 = vld [vmem:[#allocation5 + $0x60] sm:$0xff]
        %v235 = vld [vmem:[#allocation5 + $0x68] sm:$0xff]
        %v236 = vld [vmem:[#allocation5 + $0x70] sm:$0xff]
        %v237 = vld [vmem:[#allocation5 + $0x78] sm:$0xff]
        %v238 = vld [vmem:[%s2] sm:$0x1]
        %v240 = vlaneseq
        %v241 = vshrl.u32 %v240, 7
        %v242 = vsub.s32 0, %v241
        %v243 = vrot.slane %v238, %v242
        %245 = vmatprep.subr.mxu0 0.0
        %246 = vmatpush1.msra.mxu0 %v222
        %247 = vmatprep.subr.mxu0 0.0
        %248 = vmatpush1.msra.mxu0 %v223
        %249 = vmatprep.subr.mxu0 0.0
        %250 = vmatpush1.msra.mxu0 %v224
        %251 = vmatprep.subr.mxu0 0.0
        %252 = vmatpush1.msra.mxu0 %v225
        %253 = vmatprep.subr.mxu0 0.0
        %254 = vmatpush1.msra.mxu0 %v226
        %255 = vmatprep.subr.mxu0 0.0
        %256 = vmatpush1.msra.mxu0 %v227
        %257 = vmatprep.subr.mxu0 0.0
        %258 = vmatpush1.msra.mxu0 %v228
        %259 = vmatprep.subr.mxu0 0.0
        %260 = vmatpush1.msra.mxu0 %v229
        %261 = vmatprep.subr.mxu0 0.0
        %262 = vmatpush1.msra.mxu0 %v230
        %263 = vmatprep.subr.mxu0 0.0
        %264 = vmatpush1.msra.mxu0 %v231
        %265 = vmatprep.subr.mxu0 0.0
        %266 = vmatpush1.msra.mxu0 %v232
        %267 = vmatprep.subr.mxu0 0.0
        %268 = vmatpush1.msra.mxu0 %v233
        %269 = vmatprep.subr.mxu0 0.0
        %270 = vmatpush1.msra.mxu0 %v234
        %271 = vmatprep.subr.mxu0 0.0
        %272 = vmatpush1.msra.mxu0 %v235
        %273 = vmatprep.subr.mxu0 0.0
        %274 = vmatpush1.msra.mxu0 %v236
        %275 = vmatprep.subr.mxu0 0.0
        %276 = vmatpush1.msra.mxu0 %v237
        %277 = vmatprep.subr.mxu0 0.0
        %278 = vmatpush1.msra.mxu0 0.0
        %279 = vmatprep.subr.mxu0 0.0
        %280 = vmatpush1.msra.mxu0 0.0
        %281 = vmatprep.subr.mxu0 0.0
        %282 = vmatpush1.msra.mxu0 0.0
        %283 = vmatprep.subr.mxu0 0.0
        %284 = vmatpush1.msra.mxu0 0.0
        %285 = vmatprep.subr.mxu0 0.0
        %286 = vmatpush1.msra.mxu0 0.0
        %287 = vmatprep.subr.mxu0 0.0
        %288 = vmatpush1.msra.mxu0 0.0
        %289 = vmatprep.subr.mxu0 0.0
        %290 = vmatpush1.msra.mxu0 0.0
        %291 = vmatprep.subr.mxu0 0.0
        %292 = vmatpush1.msra.mxu0 0.0
        %293 = vmatprep.subr.mxu0 0.0
        %294 = vmatpush1.msra.mxu0 0.0
        %295 = vmatprep.subr.mxu0 0.0
        %296 = vmatpush1.msra.mxu0 0.0
        %297 = vmatprep.subr.mxu0 0.0
        %298 = vmatpush1.msra.mxu0 0.0
        %299 = vmatprep.subr.mxu0 0.0
        %300 = vmatpush1.msra.mxu0 0.0
        %301 = vmatprep.subr.mxu0 0.0
        %302 = vmatpush1.msra.mxu0 0.0
        %303 = vmatprep.subr.mxu0 0.0
        %304 = vmatpush1.msra.mxu0 0.0
        %305 = vmatprep.subr.mxu0 0.0
        %306 = vmatpush1.msra.mxu0 0.0
        %307 = vmatprep.subr.mxu0 0.0
        %308 = vmatpush1.msra.mxu0 0.0
        %309 = vmatprep.mubr.f32.mxu0 0.0
        %310 = vmatmul.mubr.f32.gmra.mrb[0].mxu0 %v206
        %v311 = vpop.f32.mrb[0].mxu0
        %v312 = vadd.f32 %v243, %v311
        %v313 = vpop.f32.mrb[0].mxu0
        %314 = vmatprep.mubr.f32.mxu0 0.0
        %315 = vmatmul.mubr.f32.gmra.mrb[0].mxu0 %v207
        %v316 = vpop.f32.mrb[0].mxu0
        %v317 = vadd.f32 %v243, %v316
        %v318 = vpop.f32.mrb[0].mxu0
        %319 = vmatprep.mubr.f32.mxu0 0.0
        %320 = vmatmul.mubr.f32.gmra.mrb[0].mxu0 %v208
        %v321 = vpop.f32.mrb[0].mxu0
        %v322 = vadd.f32 %v243, %v321
        %v323 = vpop.f32.mrb[0].mxu0
        %324 = vmatprep.mubr.f32.mxu0 0.0
        %325 = vmatmul.mubr.f32.gmra.mrb[0].mxu0 %v209
        %v326 = vpop.f32.mrb[0].mxu0
        %v327 = vadd.f32 %v243, %v326
        %v328 = vpop.f32.mrb[0].mxu0
        %329 = vmatprep.mubr.f32.mxu0 0.0
        %330 = vmatmul.mubr.f32.gmra.mrb[0].mxu0 %v210
        %v331 = vpop.f32.mrb[0].mxu0
        %v332 = vadd.f32 %v243, %v331
        %v333 = vpop.f32.mrb[0].mxu0
        %334 = vmatprep.mubr.f32.mxu0 0.0
        %335 = vmatmul.mubr.f32.gmra.mrb[0].mxu0 %v211
        %v336 = vpop.f32.mrb[0].mxu0
        %v337 = vadd.f32 %v243, %v336
        %v338 = vpop.f32.mrb[0].mxu0
        %339 = vmatprep.mubr.f32.mxu0 0.0
        %340 = vmatmul.mubr.f32.gmra.mrb[0].mxu0 %v212
        %v341 = vpop.f32.mrb[0].mxu0
        %v342 = vadd.f32 %v243, %v341
        %v343 = vpop.f32.mrb[0].mxu0
        %344 = vmatprep.mubr.f32.mxu0 0.0
        %345 = vmatmul.mubr.f32.gmra.mrb[0].mxu0 %v213
        %v346 = vpop.f32.mrb[0].mxu0
        %v347 = vadd.f32 %v243, %v346
        %v348 = vpop.f32.mrb[0].mxu0
        %349 = vmatprep.mubr.f32.mxu0 0.0
        %350 = vmatmul.mubr.f32.gmra.mrb[0].mxu0 %v214
        %v351 = vpop.f32.mrb[0].mxu0
        %v352 = vadd.f32 %v243, %v351
        %v353 = vpop.f32.mrb[0].mxu0
        %354 = vmatprep.mubr.f32.mxu0 0.0
        %355 = vmatmul.mubr.f32.gmra.mrb[0].mxu0 %v215
        %v356 = vpop.f32.mrb[0].mxu0
        %v357 = vadd.f32 %v243, %v356
        %v358 = vpop.f32.mrb[0].mxu0
        %359 = vmatprep.mubr.f32.mxu0 0.0
        %360 = vmatmul.mubr.f32.gmra.mrb[0].mxu0 %v216
        %v361 = vpop.f32.mrb[0].mxu0
        %v362 = vadd.f32 %v243, %v361
        %v363 = vpop.f32.mrb[0].mxu0
        %364 = vmatprep.mubr.f32.mxu0 0.0
        %365 = vmatmul.mubr.f32.gmra.mrb[0].mxu0 %v217
        %v366 = vpop.f32.mrb[0].mxu0
        %v367 = vadd.f32 %v243, %v366
        %v368 = vpop.f32.mrb[0].mxu0
        %369 = vmatprep.mubr.f32.mxu0 0.0
        %370 = vmatmul.mubr.f32.gmra.mrb[0].mxu0 %v218
        %v371 = vpop.f32.mrb[0].mxu0
        %v372 = vadd.f32 %v243, %v371
        %v373 = vpop.f32.mrb[0].mxu0
        %374 = vmatprep.mubr.f32.mxu0 0.0
        %375 = vmatmul.mubr.f32.gmra.mrb[0].mxu0 %v219
        %v376 = vpop.f32.mrb[0].mxu0
        %v377 = vadd.f32 %v243, %v376
        %v378 = vpop.f32.mrb[0].mxu0
        %379 = vmatprep.mubr.f32.mxu0 0.0
        %380 = vmatmul.mubr.f32.gmra.mrb[0].mxu0 %v220
        %v381 = vpop.f32.mrb[0].mxu0
        %v382 = vadd.f32 %v243, %v381
        %v383 = vpop.f32.mrb[0].mxu0
        %384 = vmatprep.mubr.f32.mxu0 0.0
        %385 = vmatmul.mubr.f32.gmra.mrb[0].mxu0 %v221
        %v386 = vpop.f32.mrb[0].mxu0
        %v387 = vadd.f32 %v243, %v386
        %v388 = vpop.f32.mrb[0].mxu0
        %389 = vdwg.mxu0
        %s390 = scalar_lea.vmem [#allocation5], 128
        %v391 = vld [vmem:[%s390] sm:$0xff]
        %v392 = vld [vmem:[%s390 + $0x8] sm:$0xff]
        %v393 = vld [vmem:[%s390 + $0x10] sm:$0xff]
        %v394 = vld [vmem:[%s390 + $0x18] sm:$0xff]
        %v395 = vld [vmem:[%s390 + $0x20] sm:$0xff]
        %v396 = vld [vmem:[%s390 + $0x28] sm:$0xff]
        %v397 = vld [vmem:[%s390 + $0x30] sm:$0xff]
        %v398 = vld [vmem:[%s390 + $0x38] sm:$0xff]
        %v399 = vld [vmem:[%s390 + $0x40] sm:$0xff]
        %v400 = vld [vmem:[%s390 + $0x48] sm:$0xff]
        %v401 = vld [vmem:[%s390 + $0x50] sm:$0xff]
        %v402 = vld [vmem:[%s390 + $0x58] sm:$0xff]
        %v403 = vld [vmem:[%s390 + $0x60] sm:$0xff]
        %v404 = vld [vmem:[%s390 + $0x68] sm:$0xff]
        %v405 = vld [vmem:[%s390 + $0x70] sm:$0xff]
        %v406 = vld [vmem:[%s390 + $0x78] sm:$0xff]
        %s407 = scalar_lea.vmem %s2, 1
        %v408 = vld [vmem:[%s407] sm:$0x1]
        %v410 = vlaneseq
        %v411 = vshrl.u32 %v410, 7
        %v412 = vsub.s32 0, %v411
        %v413 = vrot.slane %v408, %v412
        %415 = vmatprep.subr.mxu0 0.0
        %416 = vmatpush1.msra.mxu0 %v391
        %417 = vmatprep.subr.mxu0 0.0
        %418 = vmatpush1.msra.mxu0 %v392
        %419 = vmatprep.subr.mxu0 0.0
        %420 = vmatpush1.msra.mxu0 %v393
        %421 = vmatprep.subr.mxu0 0.0
        %422 = vmatpush1.msra.mxu0 %v394
        %423 = vmatprep.subr.mxu0 0.0
        %424 = vmatpush1.msra.mxu0 %v395
        %425 = vmatprep.subr.mxu0 0.0
        %426 = vmatpush1.msra.mxu0 %v396
        %427 = vmatprep.subr.mxu0 0.0
        %428 = vmatpush1.msra.mxu0 %v397
        %429 = vmatprep.subr.mxu0 0.0
        %430 = vmatpush1.msra.mxu0 %v398
        %431 = vmatprep.subr.mxu0 0.0
        %432 = vmatpush1.msra.mxu0 %v399
        %433 = vmatprep.subr.mxu0 0.0
        %434 = vmatpush1.msra.mxu0 %v400
        %435 = vmatprep.subr.mxu0 0.0
        %436 = vmatpush1.msra.mxu0 %v401
        %437 = vmatprep.subr.mxu0 0.0
        %438 = vmatpush1.msra.mxu0 %v402
        %439 = vmatprep.subr.mxu0 0.0
        %440 = vmatpush1.msra.mxu0 %v403
        %441 = vmatprep.subr.mxu0 0.0
        %442 = vmatpush1.msra.mxu0 %v404
        %443 = vmatprep.subr.mxu0 0.0
        %444 = vmatpush1.msra.mxu0 %v405
        %445 = vmatprep.subr.mxu0 0.0
        %446 = vmatpush1.msra.mxu0 %v406
        %447 = vmatprep.subr.mxu0 0.0
        %448 = vmatpush1.msra.mxu0 0.0
        %449 = vmatprep.subr.mxu0 0.0
        %450 = vmatpush1.msra.mxu0 0.0
        %451 = vmatprep.subr.mxu0 0.0
        %452 = vmatpush1.msra.mxu0 0.0
        %453 = vmatprep.subr.mxu0 0.0
        %454 = vmatpush1.msra.mxu0 0.0
        %455 = vmatprep.subr.mxu0 0.0
        %456 = vmatpush1.msra.mxu0 0.0
        %457 = vmatprep.subr.mxu0 0.0
        %458 = vmatpush1.msra.mxu0 0.0
        %459 = vmatprep.subr.mxu0 0.0
        %460 = vmatpush1.msra.mxu0 0.0
        %461 = vmatprep.subr.mxu0 0.0
        %462 = vmatpush1.msra.mxu0 0.0
        %463 = vmatprep.subr.mxu0 0.0
        %464 = vmatpush1.msra.mxu0 0.0
        %465 = vmatprep.subr.mxu0 0.0
        %466 = vmatpush1.msra.mxu0 0.0
        %467 = vmatprep.subr.mxu0 0.0
        %468 = vmatpush1.msra.mxu0 0.0
        %469 = vmatprep.subr.mxu0 0.0
        %470 = vmatpush1.msra.mxu0 0.0
        %471 = vmatprep.subr.mxu0 0.0
        %472 = vmatpush1.msra.mxu0 0.0
        %473 = vmatprep.subr.mxu0 0.0
        %474 = vmatpush1.msra.mxu0 0.0
        %475 = vmatprep.subr.mxu0 0.0
        %476 = vmatpush1.msra.mxu0 0.0
        %477 = vmatprep.subr.mxu0 0.0
        %478 = vmatpush1.msra.mxu0 0.0
        %479 = vmatprep.mubr.f32.mxu0 0.0
        %480 = vmatmul.mubr.f32.gmra.mrb[0].mxu0 %v312
        %v481 = vpop.f32.mrb[0].mxu0
        %v482 = vadd.f32 %v413, %v481
        %v483 = vpop.f32.mrb[0].mxu0
        %484 = vmatprep.mubr.f32.mxu0 0.0
        %485 = vmatmul.mubr.f32.gmra.mrb[0].mxu0 %v317
        %v486 = vpop.f32.mrb[0].mxu0
        %v487 = vadd.f32 %v413, %v486
        %v488 = vpop.f32.mrb[0].mxu0
        %489 = vmatprep.mubr.f32.mxu0 0.0
        %490 = vmatmul.mubr.f32.gmra.mrb[0].mxu0 %v322
        %v491 = vpop.f32.mrb[0].mxu0
        %v492 = vadd.f32 %v413, %v491
        %v493 = vpop.f32.mrb[0].mxu0
        %494 = vmatprep.mubr.f32.mxu0 0.0
        %495 = vmatmul.mubr.f32.gmra.mrb[0].mxu0 %v327
        %v496 = vpop.f32.mrb[0].mxu0
        %v497 = vadd.f32 %v413, %v496
        %v498 = vpop.f32.mrb[0].mxu0
        %499 = vmatprep.mubr.f32.mxu0 0.0
        %500 = vmatmul.mubr.f32.gmra.mrb[0].mxu0 %v332
        %v501 = vpop.f32.mrb[0].mxu0
        %v502 = vadd.f32 %v413, %v501
        %v503 = vpop.f32.mrb[0].mxu0
        %504 = vmatprep.mubr.f32.mxu0 0.0
        %505 = vmatmul.mubr.f32.gmra.mrb[0].mxu0 %v337
        %v506 = vpop.f32.mrb[0].mxu0
        %v507 = vadd.f32 %v413, %v506
        %v508 = vpop.f32.mrb[0].mxu0
        %509 = vmatprep.mubr.f32.mxu0 0.0
        %510 = vmatmul.mubr.f32.gmra.mrb[0].mxu0 %v342
        %v511 = vpop.f32.mrb[0].mxu0
        %v512 = vadd.f32 %v413, %v511
        %v513 = vpop.f32.mrb[0].mxu0
        %514 = vmatprep.mubr.f32.mxu0 0.0
        %515 = vmatmul.mubr.f32.gmra.mrb[0].mxu0 %v347
        %v516 = vpop.f32.mrb[0].mxu0
        %v517 = vadd.f32 %v413, %v516
        %v518 = vpop.f32.mrb[0].mxu0
        %519 = vmatprep.mubr.f32.mxu0 0.0
        %520 = vmatmul.mubr.f32.gmra.mrb[0].mxu0 %v352
        %v521 = vpop.f32.mrb[0].mxu0
        %v522 = vadd.f32 %v413, %v521
        %v523 = vpop.f32.mrb[0].mxu0
        %524 = vmatprep.mubr.f32.mxu0 0.0
        %525 = vmatmul.mubr.f32.gmra.mrb[0].mxu0 %v357
        %v526 = vpop.f32.mrb[0].mxu0
        %v527 = vadd.f32 %v413, %v526
        %v528 = vpop.f32.mrb[0].mxu0
        %529 = vmatprep.mubr.f32.mxu0 0.0
        %530 = vmatmul.mubr.f32.gmra.mrb[0].mxu0 %v362
        %v531 = vpop.f32.mrb[0].mxu0
        %v532 = vadd.f32 %v413, %v531
        %v533 = vpop.f32.mrb[0].mxu0
        %534 = vmatprep.mubr.f32.mxu0 0.0
        %535 = vmatmul.mubr.f32.gmra.mrb[0].mxu0 %v367
        %v536 = vpop.f32.mrb[0].mxu0
        %v537 = vadd.f32 %v413, %v536
        %v538 = vpop.f32.mrb[0].mxu0
        %539 = vmatprep.mubr.f32.mxu0 0.0
        %540 = vmatmul.mubr.f32.gmra.mrb[0].mxu0 %v372
        %v541 = vpop.f32.mrb[0].mxu0
        %v542 = vadd.f32 %v413, %v541
        %v543 = vpop.f32.mrb[0].mxu0
        %544 = vmatprep.mubr.f32.mxu0 0.0
        %545 = vmatmul.mubr.f32.gmra.mrb[0].mxu0 %v377
        %v546 = vpop.f32.mrb[0].mxu0
        %v547 = vadd.f32 %v413, %v546
        %v548 = vpop.f32.mrb[0].mxu0
        %549 = vmatprep.mubr.f32.mxu0 0.0
        %550 = vmatmul.mubr.f32.gmra.mrb[0].mxu0 %v382
        %v551 = vpop.f32.mrb[0].mxu0
        %v552 = vadd.f32 %v413, %v551
        %v553 = vpop.f32.mrb[0].mxu0
        %554 = vmatprep.mubr.f32.mxu0 0.0
        %555 = vmatmul.mubr.f32.gmra.mrb[0].mxu0 %v387
        %v556 = vpop.f32.mrb[0].mxu0
        %v557 = vadd.f32 %v413, %v556
        %v558 = vpop.f32.mrb[0].mxu0
        %559 = vdwg.mxu0
        %s560 = scalar_lea.vmem [#allocation5], 256
        %v561 = vld [vmem:[%s560] sm:$0xff]
        %v562 = vld [vmem:[%s560 + $0x8] sm:$0xff]
        %v563 = vld [vmem:[%s560 + $0x10] sm:$0xff]
        %v564 = vld [vmem:[%s560 + $0x18] sm:$0xff]
        %v565 = vld [vmem:[%s560 + $0x20] sm:$0xff]
        %v566 = vld [vmem:[%s560 + $0x28] sm:$0xff]
        %v567 = vld [vmem:[%s560 + $0x30] sm:$0xff]
        %v568 = vld [vmem:[%s560 + $0x38] sm:$0xff]
        %v569 = vld [vmem:[%s560 + $0x40] sm:$0xff]
        %v570 = vld [vmem:[%s560 + $0x48] sm:$0xff]
        %v571 = vld [vmem:[%s560 + $0x50] sm:$0xff]
        %v572 = vld [vmem:[%s560 + $0x58] sm:$0xff]
        %v573 = vld [vmem:[%s560 + $0x60] sm:$0xff]
        %v574 = vld [vmem:[%s560 + $0x68] sm:$0xff]
        %v575 = vld [vmem:[%s560 + $0x70] sm:$0xff]
        %v576 = vld [vmem:[%s560 + $0x78] sm:$0xff]
        %s577 = scalar_lea.vmem %s2, 2
        %v578 = vld [vmem:[%s577] sm:$0x1]
        %v580 = vlaneseq
        %v581 = vshrl.u32 %v580, 7
        %v582 = vsub.s32 0, %v581
        %v583 = vrot.slane %v578, %v582
        %585 = vmatprep.subr.mxu0 0.0
        %586 = vmatpush1.msra.mxu0 %v561
        %587 = vmatprep.subr.mxu0 0.0
        %588 = vmatpush1.msra.mxu0 %v562
        %589 = vmatprep.subr.mxu0 0.0
        %590 = vmatpush1.msra.mxu0 %v563
        %591 = vmatprep.subr.mxu0 0.0
        %592 = vmatpush1.msra.mxu0 %v564
        %593 = vmatprep.subr.mxu0 0.0
        %594 = vmatpush1.msra.mxu0 %v565
        %595 = vmatprep.subr.mxu0 0.0
        %596 = vmatpush1.msra.mxu0 %v566
        %597 = vmatprep.subr.mxu0 0.0
        %598 = vmatpush1.msra.mxu0 %v567
        %599 = vmatprep.subr.mxu0 0.0
        %600 = vmatpush1.msra.mxu0 %v568
        %601 = vmatprep.subr.mxu0 0.0
        %602 = vmatpush1.msra.mxu0 %v569
        %603 = vmatprep.subr.mxu0 0.0
        %604 = vmatpush1.msra.mxu0 %v570
        %605 = vmatprep.subr.mxu0 0.0
        %606 = vmatpush1.msra.mxu0 %v571
        %607 = vmatprep.subr.mxu0 0.0
        %608 = vmatpush1.msra.mxu0 %v572
        %609 = vmatprep.subr.mxu0 0.0
        %610 = vmatpush1.msra.mxu0 %v573
        %611 = vmatprep.subr.mxu0 0.0
        %612 = vmatpush1.msra.mxu0 %v574
        %613 = vmatprep.subr.mxu0 0.0
        %614 = vmatpush1.msra.mxu0 %v575
        %615 = vmatprep.subr.mxu0 0.0
        %616 = vmatpush1.msra.mxu0 %v576
        %617 = vmatprep.subr.mxu0 0.0
        %618 = vmatpush1.msra.mxu0 0.0
        %619 = vmatprep.subr.mxu0 0.0
        %620 = vmatpush1.msra.mxu0 0.0
        %621 = vmatprep.subr.mxu0 0.0
        %622 = vmatpush1.msra.mxu0 0.0
        %623 = vmatprep.subr.mxu0 0.0
        %624 = vmatpush1.msra.mxu0 0.0
        %625 = vmatprep.subr.mxu0 0.0
        %626 = vmatpush1.msra.mxu0 0.0
        %627 = vmatprep.subr.mxu0 0.0
        %628 = vmatpush1.msra.mxu0 0.0
        %629 = vmatprep.subr.mxu0 0.0
        %630 = vmatpush1.msra.mxu0 0.0
        %631 = vmatprep.subr.mxu0 0.0
        %632 = vmatpush1.msra.mxu0 0.0
        %633 = vmatprep.subr.mxu0 0.0
        %634 = vmatpush1.msra.mxu0 0.0
        %635 = vmatprep.subr.mxu0 0.0
        %636 = vmatpush1.msra.mxu0 0.0
        %637 = vmatprep.subr.mxu0 0.0
        %638 = vmatpush1.msra.mxu0 0.0
        %639 = vmatprep.subr.mxu0 0.0
        %640 = vmatpush1.msra.mxu0 0.0
        %641 = vmatprep.subr.mxu0 0.0
        %642 = vmatpush1.msra.mxu0 0.0
        %643 = vmatprep.subr.mxu0 0.0
        %644 = vmatpush1.msra.mxu0 0.0
        %645 = vmatprep.subr.mxu0 0.0
        %646 = vmatpush1.msra.mxu0 0.0
        %647 = vmatprep.subr.mxu0 0.0
        %648 = vmatpush1.msra.mxu0 0.0
        %649 = vmatprep.mubr.f32.mxu0 0.0
        %650 = vmatmul.mubr.f32.gmra.mrb[0].mxu0 %v482
        %v651 = vpop.f32.mrb[0].mxu0
        %v652 = vadd.f32 %v583, %v651
        %v653 = vpop.f32.mrb[0].mxu0
        %654 = vmatprep.mubr.f32.mxu0 0.0
        %655 = vmatmul.mubr.f32.gmra.mrb[0].mxu0 %v487
        %v656 = vpop.f32.mrb[0].mxu0
        %v657 = vadd.f32 %v583, %v656
        %v658 = vpop.f32.mrb[0].mxu0
        %659 = vmatprep.mubr.f32.mxu0 0.0
        %660 = vmatmul.mubr.f32.gmra.mrb[0].mxu0 %v492
        %v661 = vpop.f32.mrb[0].mxu0
        %v662 = vadd.f32 %v583, %v661
        %v663 = vpop.f32.mrb[0].mxu0
        %664 = vmatprep.mubr.f32.mxu0 0.0
        %665 = vmatmul.mubr.f32.gmra.mrb[0].mxu0 %v497
        %v666 = vpop.f32.mrb[0].mxu0
        %v667 = vadd.f32 %v583, %v666
        %v668 = vpop.f32.mrb[0].mxu0
        %669 = vmatprep.mubr.f32.mxu0 0.0
        %670 = vmatmul.mubr.f32.gmra.mrb[0].mxu0 %v502
        %v671 = vpop.f32.mrb[0].mxu0
        %v672 = vadd.f32 %v583, %v671
        %v673 = vpop.f32.mrb[0].mxu0
        %674 = vmatprep.mubr.f32.mxu0 0.0
        %675 = vmatmul.mubr.f32.gmra.mrb[0].mxu0 %v507
        %v676 = vpop.f32.mrb[0].mxu0
        %v677 = vadd.f32 %v583, %v676
        %v678 = vpop.f32.mrb[0].mxu0
        %679 = vmatprep.mubr.f32.mxu0 0.0
        %680 = vmatmul.mubr.f32.gmra.mrb[0].mxu0 %v512
        %v681 = vpop.f32.mrb[0].mxu0
        %v682 = vadd.f32 %v583, %v681
        %v683 = vpop.f32.mrb[0].mxu0
        %684 = vmatprep.mubr.f32.mxu0 0.0
        %685 = vmatmul.mubr.f32.gmra.mrb[0].mxu0 %v517
        %v686 = vpop.f32.mrb[0].mxu0
        %v687 = vadd.f32 %v583, %v686
        %v688 = vpop.f32.mrb[0].mxu0
        %689 = vmatprep.mubr.f32.mxu0 0.0
        %690 = vmatmul.mubr.f32.gmra.mrb[0].mxu0 %v522
        %v691 = vpop.f32.mrb[0].mxu0
        %v692 = vadd.f32 %v583, %v691
        %v693 = vpop.f32.mrb[0].mxu0
        %694 = vmatprep.mubr.f32.mxu0 0.0
        %695 = vmatmul.mubr.f32.gmra.mrb[0].mxu0 %v527
        %v696 = vpop.f32.mrb[0].mxu0
        %v697 = vadd.f32 %v583, %v696
        %v698 = vpop.f32.mrb[0].mxu0
        %699 = vmatprep.mubr.f32.mxu0 0.0
        %700 = vmatmul.mubr.f32.gmra.mrb[0].mxu0 %v532
        %v701 = vpop.f32.mrb[0].mxu0
        %v702 = vadd.f32 %v583, %v701
        %v703 = vpop.f32.mrb[0].mxu0
        %704 = vmatprep.mubr.f32.mxu0 0.0
        %705 = vmatmul.mubr.f32.gmra.mrb[0].mxu0 %v537
        %v706 = vpop.f32.mrb[0].mxu0
        %v707 = vadd.f32 %v583, %v706
        %v708 = vpop.f32.mrb[0].mxu0
        %709 = vmatprep.mubr.f32.mxu0 0.0
        %710 = vmatmul.mubr.f32.gmra.mrb[0].mxu0 %v542
        %v711 = vpop.f32.mrb[0].mxu0
        %v712 = vadd.f32 %v583, %v711
        %v713 = vpop.f32.mrb[0].mxu0
        %714 = vmatprep.mubr.f32.mxu0 0.0
        %715 = vmatmul.mubr.f32.gmra.mrb[0].mxu0 %v547
        %v716 = vpop.f32.mrb[0].mxu0
        %v717 = vadd.f32 %v583, %v716
        %v718 = vpop.f32.mrb[0].mxu0
        %719 = vmatprep.mubr.f32.mxu0 0.0
        %720 = vmatmul.mubr.f32.gmra.mrb[0].mxu0 %v552
        %v721 = vpop.f32.mrb[0].mxu0
        %v722 = vadd.f32 %v583, %v721
        %v723 = vpop.f32.mrb[0].mxu0
        %724 = vmatprep.mubr.f32.mxu0 0.0
        %725 = vmatmul.mubr.f32.gmra.mrb[0].mxu0 %v557
        %v726 = vpop.f32.mrb[0].mxu0
        %v727 = vadd.f32 %v583, %v726
        %v728 = vpop.f32.mrb[0].mxu0
        %729 = vdwg.mxu0
        %730 = vst [vmem:[%s203] sm:$0xff] %v652
        %731 = vst [vmem:[%s203 + $0x8] sm:$0xff] %v657
        %732 = vst [vmem:[%s203 + $0x10] sm:$0xff] %v662
        %733 = vst [vmem:[%s203 + $0x18] sm:$0xff] %v667
        %734 = vst [vmem:[%s203 + $0x20] sm:$0xff] %v672
        %735 = vst [vmem:[%s203 + $0x28] sm:$0xff] %v677
        %736 = vst [vmem:[%s203 + $0x30] sm:$0xff] %v682
        %737 = vst [vmem:[%s203 + $0x38] sm:$0xff] %v687
        %738 = vst [vmem:[%s203 + $0x40] sm:$0xff] %v692
        %739 = vst [vmem:[%s203 + $0x48] sm:$0xff] %v697
        %740 = vst [vmem:[%s203 + $0x50] sm:$0xff] %v702
        %741 = vst [vmem:[%s203 + $0x58] sm:$0xff] %v707
        %742 = vst [vmem:[%s203 + $0x60] sm:$0xff] %v712
        %743 = vst [vmem:[%s203 + $0x68] sm:$0xff] %v717
        %744 = vst [vmem:[%s203 + $0x70] sm:$0xff] %v722
        %745 = vst [vmem:[%s203 + $0x78] sm:$0xff] %v727
        %s746 = sand.u32 %s97, 1
        %s747 = scalar_lea.sflag [#allocation4], %s746
        %s748 = sand.u32 %s97, 1
        %s749 = smul.addr %s748, 128
        %s750 = scalar_lea.vmem [#allocation7], %s749
        // Predicated region
        $region41: #{tpu_custom_call.1} parent=31 // pred_check
          %p751 = pneg %p107
        $region42: #{tpu_custom_call.1} parent=31 // pred_check_branch
          %753 = sbr.rel (%p751) target = $region44
        $region43: #{tpu_custom_call.1} parent=31 // pred_region
          %s754 = smul.u32 16, %s21
          %s756 = ssub.s32 2048, 2048
          %757 = vsyncadd %s747, %s756
          %s758 = smul.addr %s754, 128
          %s759 = scalar_lea.hbm %s3, %s758
          %s760 = sshll.u32 %s750, 4
          %s761 = int_to_ptr.vmem [resolvable:$true] %s760
          %766 = dma.vmem_to_hbm [thread:$0]  %s761, 2048, %s759, %s747, 128, 128, 8
        $region44: #{tpu_custom_call.1} parent=31 // pred_fallthru
          _
      $region32: #{tpu_custom_call.1} parent=5 // pred_fallthru
        _
      %p767 = scmp.le.s32.totalorder 2, %s16
      // Predicated region
      $region45: #{tpu_custom_call.1} parent=5 // pred_check
        %p768 = pneg %p767
      $region46: #{tpu_custom_call.1} parent=5 // pred_check_branch
        %770 = sbr.rel (%p768) target = $region48
      $region47: #{tpu_custom_call.1} parent=5 // pred_region
        %s771 = ssub.s32 %s16, 2
        // Predicated region
        $region49: #{tpu_custom_call.1} parent=47 // pred_check
          %p772 = pneg %p113
        $region50: #{tpu_custom_call.1} parent=47 // pred_check_branch
          %774 = sbr.rel (%p772) target = $region52
        $region51: #{tpu_custom_call.1} parent=47 // pred_region
          %s775 = sand.u32 %s98, 1
          %s776 = scalar_lea.sflag [#allocation4], %s775
          %s777 = sand.u32 %s98, 1
          %s778 = smul.addr %s777, 128
          %s779 = scalar_lea.vmem [#allocation7], %s778
          %780 = dma.done %s776, 2048
        $region52: #{tpu_custom_call.1} parent=47 // pred_fallthru
          _
      $region48: #{tpu_custom_call.1} parent=5 // pred_fallthru
        _
    $region6: #{tpu_custom_call.1} parent=1 // loop_footer
      %s20 = sadd.s32 1, %s16
    $region7: #{tpu_custom_call.1} parent=1 // loop_footer_branch
      %15 = sbr.rel target = $region3
    $region8: #{tpu_custom_call.1} parent=1 // loop_exit
      _
    %781 = vsyncpa [#allocation3], 1
    %s782 = scalar_lea.sflag [#allocation3], 1
    %783 = vsyncpa %s782, 1
    %784 = vsyncpa [#allocation6], 1
    %785 = vsyncpa [#allocation4], 1
    %s786 = scalar_lea.sflag [#allocation4], 1
    %787 = vsyncpa %s786, 1

</llo_original>
